<compile_context>
chip_gen: v5e
topology: v5e:2x2
jax: 0.10.0
libtpu: 0.0.40
codegen_flags: <defaults>
</compile_context>

<pallas_src>
import functools

import jax
import jax.numpy as jnp
import numpy as np
from jax.experimental import pallas as pl
from jax.experimental.pallas import tpu as pltpu

_LANE = 128
_MAX_TILE = 16384        # lane-tile cap: ~4 MiB double-buffered VMEM (safe on v5e's 16 MiB scoped default)
_MIN_TOTAL_STEPS = 4     # keep >=2 (ideally >=4) parallel grid steps so both v7x TensorCores are fed


def _round_up(x, m):
    return ((x + m - 1) // m) * m


def _cdiv(a, b):
    return -(-a // b)


def _scale_constants(lims, grid_sizes, scale):
    # torch: grid_sizes[d].float() // scale   (float floor-division)
    sizes_f = tuple(float(grid_sizes[d]) // float(scale) for d in range(3))
    return sizes_f, int(sizes_f[0]), int(sizes_f[2])


def _make_kernel(num_scales):
    """Fused quantizer: every scale computed from one read of the (3, TN) block.

    Outputs (per scale s):
      pint rows [5s .. 5s+4] = [xidx, yidx, zidx, top_flat, front_flat]  (int32)
      pres rows [3s .. 3s+2] = [xres, yres, zres]                        (float32)
    Per-scale constants arrive as tiny VMEM inputs (fc/ic), so nothing is
    captured by the kernel closure.
    """
    def kernel(pc_ref, fc_ref, ic_ref, pint_ref, pres_ref):
        pc = pc_ref[...]                                       # (3, TN) f32
        for s in range(num_scales):
            mul = fc_ref[0:3, 2 * s:2 * s + 1]                 # (3,1)  sizes/(max-min)
            add = fc_ref[0:3, 2 * s + 1:2 * s + 2]             # (3,1) -min*sizes/(max-min)
            idx_f = pc * mul + add                             # (3, TN)
            idx_i = idx_f.astype(jnp.int32)                    # trunc toward 0, like .long()
            pint_ref[5 * s:5 * s + 3, :] = idx_i
            pres_ref[3 * s:3 * s + 3, :] = idx_f - idx_i.astype(jnp.float32)
            # Both flattened view indices in ONE (2, TN) store instead of two
            # single-sublane stores (vst is the scarce VLIW slot).
            cx = ic_ref[0:2, 3 * s + 0:3 * s + 1]              # [[sx],   [sx*sz]]
            cy = ic_ref[0:2, 3 * s + 1:3 * s + 2]              # [[1],    [sz]]
            cz = ic_ref[0:2, 3 * s + 2:3 * s + 3]              # [[0],    [1]]
            xi = idx_i[0:1, :]
            yi = idx_i[1:2, :]
            zi = idx_i[2:3, :]
            pint_ref[5 * s + 3:5 * s + 5, :] = xi * cx + yi * cy + zi * cz
    return kernel


@functools.lru_cache(maxsize=None)
def _build_forward(lims, grid_meters, scales):
    """Build a jitted forward for a fixed (lims, grid_meters, scales) config."""
    lims = tuple(tuple(float(v) for v in ax) for ax in lims)
    grid_sizes = tuple(int(round((lims[d][1] - lims[d][0]) / float(grid_meters[d])))
                       for d in range(3))
    num_scales = len(scales)

    # Per-scale constants, computed once at Python level and fed as tiny inputs.
    fconsts = np.zeros((8, 128), np.float32)
    iconsts = np.zeros((8, 128), np.int32)
    for s, scale in enumerate(scales):
        sizes_f, sx, sz = _scale_constants(lims, grid_sizes, scale)
        sy = int(sizes_f[1])
        # Static guard: flattened front-view index must fit int32.
        assert (sx - 1) * sx * sz + (sy - 1) * sz + (sz - 1) < 2 ** 31, \
            "flattened front-view index would overflow int32 for this grid/scale"
        # TODO(synk): promote flat indices to int64 (needs jax x64) if this ever fires.
        for d in range(3):
            rng = lims[d][1] - lims[d][0]
            mul = sizes_f[d] / rng               # divide folded into one multiply
            fconsts[d, 2 * s] = mul
            fconsts[d, 2 * s + 1] = -lims[d][0] * mul
        iconsts[0, 3 * s + 0] = sx
        iconsts[1, 3 * s + 0] = sx * sz
        iconsts[0, 3 * s + 1] = 1
        iconsts[1, 3 * s + 1] = sz
        iconsts[0, 3 * s + 2] = 0
        iconsts[1, 3 * s + 2] = 1

    kernel = _make_kernel(num_scales)

    @jax.jit
    def forward(pc):
        B, N, _ = pc.shape

        # Lane tiling: lane-dense tiles, but keep >= _MIN_TOTAL_STEPS parallel
        # grid steps so v7x's 2 TensorCores both get work even when B == 1.
        n128 = _round_up(N, _LANE)
        n_tiles = max(_cdiv(_MIN_TOTAL_STEPS, B), _cdiv(n128, _MAX_TILE))
        tile_n = _round_up(_cdiv(n128, n_tiles), _LANE)
        Npad = tile_n * n_tiles

        coords = jnp.transpose(pc[:, :, :3].astype(jnp.float32), (0, 2, 1))   # (B,3,N)
        coords_pad = jnp.pad(coords, ((0, 0), (0, 0), (0, Npad - N)))

        spec_pc = pl.BlockSpec((None, 3, tile_n), lambda b, n: (b, 0, n))
        spec_c = pl.BlockSpec((8, 128), lambda b, n: (0, 0))
        spec_int = pl.BlockSpec((None, 5 * num_scales, tile_n), lambda b, n: (b, 0, n))
        spec_res = pl.BlockSpec((None, 3 * num_scales, tile_n), lambda b, n: (b, 0, n))

        pint, pres = pl.pallas_call(
            kernel,
            out_shape=(jax.ShapeDtypeStruct((B, 5 * num_scales, Npad), jnp.int32),
                       jax.ShapeDtypeStruct((B, 3 * num_scales, Npad), jnp.float32)),
            grid=(B, Npad // tile_n),
            in_specs=[spec_pc, spec_c, spec_c],
            out_specs=(spec_int, spec_res),
            compiler_params=pltpu.CompilerParams(
                dimension_semantics=("parallel", "parallel")),
        )(coords_pad, jnp.asarray(fconsts), jnp.asarray(iconsts))

        vr = {'top': {'idx': {}, 'coord': {}, 'res': {}},
              'front': {'idx': {}, 'coord': {}, 'res': {}}}
        for si, scale in enumerate(scales):
            r0 = 5 * si
            # Slice in the (B, rows, N) layout first; transpose only what is needed.
            front_coord = jnp.transpose(pint[:, r0:r0 + 3, :N], (0, 2, 1))   # (B,N,3) [x,y,z]
            top_coord = jnp.transpose(pint[:, r0:r0 + 2, :N], (0, 2, 1))     # (B,N,2) [x,y]
            top_idx = pint[:, r0 + 3, :N]                                    # (B,N)
            front_idx = pint[:, r0 + 4, :N]                                  # (B,N)
            xres = pres[:, 3 * si + 0, :N]
            yres = pres[:, 3 * si + 1, :N]
            zres = pres[:, 3 * si + 2, :N]
            top_res = jnp.stack([xres, yres], axis=-1)                       # (B,N,2)
            front_res = jnp.stack([xres, zres], axis=-1)                     # (B,N,2)

            vr['top']['idx'][scale] = [top_idx[i] for i in range(B)]
            vr['top']['coord'][scale] = [top_coord[i] for i in range(B)]
            vr['top']['res'][scale] = [top_res[i] for i in range(B)]
            vr['front']['idx'][scale] = [front_idx[i] for i in range(B)]
            vr['front']['coord'][scale] = [front_coord[i] for i in range(B)]
            vr['front']['res'][scale] = [front_res[i] for i in range(B)]

        # forward() never applies filter_pc / keep_mask (filter_pc = pc_i), so 'pc'
        # is the unfiltered per-batch cloud, matching the reference.
        # TODO(synk): data-dependent boolean-mask filtering (filter_pc / keep_mask)
        # produces dynamic shapes and has no static-shape Pallas equivalent.
        return {'pc': [pc[i] for i in range(B)], 'view_reprenstation': vr}

    return forward


def pc_preprocessor_3d(pc, lims, grid_meters, scales=(0.5, 1)):
    """Forward pass of PcPreprocessor3D.

    pc: (B, N, C) float32 with columns [x, y, z, ...].
    Returns the same nested structure as the PyTorch module.
    Indices are int32 (PyTorch uses int64; int32 covers these grid sizes).
    """
    lims_t = tuple(tuple(float(v) for v in ax) for ax in lims)
    gm_t = tuple(float(v) for v in grid_meters)
    forward = _build_forward(lims_t, gm_t, tuple(scales))
    return forward(pc)


if __name__ == "__main__":
    lims = [[0.0, 16.0], [0.0, 16.0], [0.0, 4.0]]
    grid_meters = [1.0, 1.0, 0.5]       # grid_sizes -> [16, 16, 8]
    scales = (0.5, 1)
    B, N, C = 2, 200, 4

    key = jax.random.PRNGKey(0)
    kx, kf = jax.random.split(key)
    xyz = jax.random.uniform(
        kx, (B, N, 3),
        minval=jnp.array([0.1, 0.1, 0.1]),
        maxval=jnp.array([15.9, 15.9, 3.9]))
    feat = jax.random.uniform(kf, (B, N, 1))
    pc = jnp.concatenate([xyz, feat], axis=-1).astype(jnp.float32)

    out = pc_preprocessor_3d(pc, lims, grid_meters, scales)
    out = jax.block_until_ready(out)

    # Sanity checks: coord + res must reconstruct the continuous index; flat
    # indices must be consistent with the coords; top coord == front coord[:, :2].
    pc_np = np.asarray(pc)
    grid_sizes = [int(round((lims[d][1] - lims[d][0]) / grid_meters[d]))
                  for d in range(3)]
    for scale in scales:
        sizes = [float(grid_sizes[d]) // float(scale) for d in range(3)]
        for i in range(B):
            idx_f = [
                (pc_np[i, :, d] - lims[d][0]) / (lims[d][1] - lims[d][0]) * sizes[d]
                for d in range(3)]
            fc = np.asarray(out['view_reprenstation']['front']['coord'][scale][i])
            tc = np.asarray(out['view_reprenstation']['top']['coord'][scale][i])
            tr = np.asarray(out['view_reprenstation']['top']['res'][scale][i])
            fr = np.asarray(out['view_reprenstation']['front']['res'][scale][i])
            np.testing.assert_allclose(fc[:, 0].astype(np.float32) + tr[:, 0],
                                       idx_f[0].astype(np.float32), rtol=1e-4, atol=1e-4)
            np.testing.assert_allclose(fc[:, 1].astype(np.float32) + tr[:, 1],
                                       idx_f[1].astype(np.float32), rtol=1e-4, atol=1e-4)
            np.testing.assert_allclose(fc[:, 2].astype(np.float32) + fr[:, 1],
                                       idx_f[2].astype(np.float32), rtol=1e-4, atol=1e-4)
            np.testing.assert_allclose(fc[:, 0].astype(np.float32) + fr[:, 0],
                                       idx_f[0].astype(np.float32), rtol=1e-4, atol=1e-4)
            np.testing.assert_array_equal(tc, fc[:, :2])
            ti = np.asarray(out['view_reprenstation']['top']['idx'][scale][i])
            fi = np.asarray(out['view_reprenstation']['front']['idx'][scale][i])
            sx, sz = int(sizes[0]), int(sizes[2])
            np.testing.assert_array_equal(ti, fc[:, 0] * sx + fc[:, 1])
            np.testing.assert_array_equal(
                fi, fc[:, 0] * sx * sz + fc[:, 1] * sz + fc[:, 2])
            np.testing.assert_allclose(
                np.asarray(out['pc'][i]), pc_np[i], rtol=0, atol=0)

    print("KERNEL_OK")
</pallas_src>

<mosaic_0001>
module attributes {stable_mosaic.version = 11 : i64} {
  func.func @kernel(%arg0: i32, %arg1: i32, %arg2: memref<1x3x128xf32, #tpu.memory_space<vmem>>, %arg3: memref<8x128xf32, #tpu.memory_space<vmem>>, %arg4: memref<8x128xi32, #tpu.memory_space<vmem>>, %arg5: memref<1x10x128xi32, #tpu.memory_space<vmem>>, %arg6: memref<1x6x128xf32, #tpu.memory_space<vmem>>) attributes {dimension_semantics = [#tpu.dimension_semantics<parallel>, #tpu.dimension_semantics<parallel>], iteration_bounds = array<i64: 2, 2>, scalar_prefetch = 0 : i64, scratch_operands = 0 : i64, tpu.core_type = #tpu.core_type<tc>, window_params = [{transform_indices = @transform_0, window_bounds = array<i64: 1, 3, 128>}, {pipeline_mode = #tpu.pipeline_mode<synchronous>, transform_indices = @transform_1, window_bounds = array<i64: 8, 128>}, {pipeline_mode = #tpu.pipeline_mode<synchronous>, transform_indices = @transform_2, window_bounds = array<i64: 8, 128>}, {transform_indices = @transform_3, window_bounds = array<i64: 1, 10, 128>}, {transform_indices = @transform_4, window_bounds = array<i64: 1, 6, 128>}]} {
    %c0 = arith.constant 0 : index
    %c0_0 = arith.constant 0 : index
    %c0_1 = arith.constant 0 : index
    %0 = vector.load %arg2[%c0, %c0_0, %c0_1] : memref<1x3x128xf32, #tpu.memory_space<vmem>>, vector<1x3x128xf32>
    %1 = vector.shape_cast %0 : vector<1x3x128xf32> to vector<3x128xf32>
    %c0_2 = arith.constant 0 : index
    %c0_3 = arith.constant 0 : index
    %2 = vector.load %arg3[%c0_2, %c0_3] : memref<8x128xf32, #tpu.memory_space<vmem>>, vector<3x1xf32>
    %c0_4 = arith.constant 0 : index
    %c1 = arith.constant 1 : index
    %3 = vector.load %arg3[%c0_4, %c1] : memref<8x128xf32, #tpu.memory_space<vmem>>, vector<3x1xf32>
    %4 = vector.broadcast %2 : vector<3x1xf32> to vector<3x128xf32>
    %5 = arith.mulf %1, %4 : vector<3x128xf32>
    %6 = vector.broadcast %3 : vector<3x1xf32> to vector<3x128xf32>
    %7 = arith.addf %5, %6 : vector<3x128xf32>
    %8 = arith.fptosi %7 : vector<3x128xf32> to vector<3x128xi32>
    %c0_5 = arith.constant 0 : index
    %c0_6 = arith.constant 0 : index
    %c0_7 = arith.constant 0 : index
    %9 = vector.load %arg5[%c0_5, %c0_6, %c0_7] : memref<1x10x128xi32, #tpu.memory_space<vmem>>, vector<1x3x128xi32>
    %10 = vector.shape_cast %9 : vector<1x3x128xi32> to vector<3x128xi32>
    %11 = vector.shape_cast %8 : vector<3x128xi32> to vector<1x3x128xi32>
    tpu.vector_store %arg5[%c0_5, %c0_6, %c0_7], %11 {strides = array<i32>} : memref<1x10x128xi32, #tpu.memory_space<vmem>>, vector<1x3x128xi32>,
    %12 = arith.sitofp %8 : vector<3x128xi32> to vector<3x128xf32>
    %13 = arith.subf %7, %12 : vector<3x128xf32>
    %c0_8 = arith.constant 0 : index
    %c0_9 = arith.constant 0 : index
    %c0_10 = arith.constant 0 : index
    %14 = vector.load %arg6[%c0_8, %c0_9, %c0_10] : memref<1x6x128xf32, #tpu.memory_space<vmem>>, vector<1x3x128xf32>
    %15 = vector.shape_cast %14 : vector<1x3x128xf32> to vector<3x128xf32>
    %16 = vector.shape_cast %13 : vector<3x128xf32> to vector<1x3x128xf32>
    tpu.vector_store %arg6[%c0_8, %c0_9, %c0_10], %16 {strides = array<i32>} : memref<1x6x128xf32, #tpu.memory_space<vmem>>, vector<1x3x128xf32>,
    %c0_11 = arith.constant 0 : index
    %c0_12 = arith.constant 0 : index
    %17 = vector.load %arg4[%c0_11, %c0_12] : memref<8x128xi32, #tpu.memory_space<vmem>>, vector<2x1xi32>
    %c0_13 = arith.constant 0 : index
    %c1_14 = arith.constant 1 : index
    %18 = vector.load %arg4[%c0_13, %c1_14] : memref<8x128xi32, #tpu.memory_space<vmem>>, vector<2x1xi32>
    %c0_15 = arith.constant 0 : index
    %c2 = arith.constant 2 : index
    %19 = vector.load %arg4[%c0_15, %c2] : memref<8x128xi32, #tpu.memory_space<vmem>>, vector<2x1xi32>
    %20 = vector.extract_strided_slice %8 {offsets = [0, 0], sizes = [1, 128], strides = [1, 1]} : vector<3x128xi32> to vector<1x128xi32>
    %21 = vector.extract_strided_slice %8 {offsets = [1, 0], sizes = [1, 128], strides = [1, 1]} : vector<3x128xi32> to vector<1x128xi32>
    %22 = vector.extract_strided_slice %8 {offsets = [2, 0], sizes = [1, 128], strides = [1, 1]} : vector<3x128xi32> to vector<1x128xi32>
    %23 = vector.broadcast %20 : vector<1x128xi32> to vector<2x128xi32>
    %24 = vector.broadcast %17 : vector<2x1xi32> to vector<2x128xi32>
    %25 = arith.muli %23, %24 : vector<2x128xi32>
    %26 = vector.broadcast %21 : vector<1x128xi32> to vector<2x128xi32>
    %27 = vector.broadcast %18 : vector<2x1xi32> to vector<2x128xi32>
    %28 = arith.muli %26, %27 : vector<2x128xi32>
    %29 = arith.addi %25, %28 : vector<2x128xi32>
    %30 = vector.broadcast %22 : vector<1x128xi32> to vector<2x128xi32>
    %31 = vector.broadcast %19 : vector<2x1xi32> to vector<2x128xi32>
    %32 = arith.muli %30, %31 : vector<2x128xi32>
    %33 = arith.addi %29, %32 : vector<2x128xi32>
    %c0_16 = arith.constant 0 : index
    %c3 = arith.constant 3 : index
    %c0_17 = arith.constant 0 : index
    %34 = vector.load %arg5[%c0_16, %c3, %c0_17] : memref<1x10x128xi32, #tpu.memory_space<vmem>>, vector<1x2x128xi32>
    %35 = vector.shape_cast %34 : vector<1x2x128xi32> to vector<2x128xi32>
    %36 = vector.shape_cast %33 : vector<2x128xi32> to vector<1x2x128xi32>
    tpu.vector_store %arg5[%c0_16, %c3, %c0_17], %36 {strides = array<i32>} : memref<1x10x128xi32, #tpu.memory_space<vmem>>, vector<1x2x128xi32>,
    %c0_18 = arith.constant 0 : index
    %c2_19 = arith.constant 2 : index
    %37 = vector.load %arg3[%c0_18, %c2_19] : memref<8x128xf32, #tpu.memory_space<vmem>>, vector<3x1xf32>
    %c0_20 = arith.constant 0 : index
    %c3_21 = arith.constant 3 : index
    %38 = vector.load %arg3[%c0_20, %c3_21] : memref<8x128xf32, #tpu.memory_space<vmem>>, vector<3x1xf32>
    %39 = vector.broadcast %37 : vector<3x1xf32> to vector<3x128xf32>
    %40 = arith.mulf %1, %39 : vector<3x128xf32>
    %41 = vector.broadcast %38 : vector<3x1xf32> to vector<3x128xf32>
    %42 = arith.addf %40, %41 : vector<3x128xf32>
    %43 = arith.fptosi %42 : vector<3x128xf32> to vector<3x128xi32>
    %c0_22 = arith.constant 0 : index
    %c5 = arith.constant 5 : index
    %c0_23 = arith.constant 0 : index
    %44 = vector.load %arg5[%c0_22, %c5, %c0_23] : memref<1x10x128xi32, #tpu.memory_space<vmem>>, vector<1x3x128xi32>
    %45 = vector.shape_cast %44 : vector<1x3x128xi32> to vector<3x128xi32>
    %46 = vector.shape_cast %43 : vector<3x128xi32> to vector<1x3x128xi32>
    tpu.vector_store %arg5[%c0_22, %c5, %c0_23], %46 {strides = array<i32>} : memref<1x10x128xi32, #tpu.memory_space<vmem>>, vector<1x3x128xi32>,
    %47 = arith.sitofp %43 : vector<3x128xi32> to vector<3x128xf32>
    %48 = arith.subf %42, %47 : vector<3x128xf32>
    %c0_24 = arith.constant 0 : index
    %c3_25 = arith.constant 3 : index
    %c0_26 = arith.constant 0 : index
    %49 = vector.load %arg6[%c0_24, %c3_25, %c0_26] : memref<1x6x128xf32, #tpu.memory_space<vmem>>, vector<1x3x128xf32>
    %50 = vector.shape_cast %49 : vector<1x3x128xf32> to vector<3x128xf32>
    %51 = vector.shape_cast %48 : vector<3x128xf32> to vector<1x3x128xf32>
    tpu.vector_store %arg6[%c0_24, %c3_25, %c0_26], %51 {strides = array<i32>} : memref<1x6x128xf32, #tpu.memory_space<vmem>>, vector<1x3x128xf32>,
    %c0_27 = arith.constant 0 : index
    %c3_28 = arith.constant 3 : index
    %52 = vector.load %arg4[%c0_27, %c3_28] : memref<8x128xi32, #tpu.memory_space<vmem>>, vector<2x1xi32>
    %c0_29 = arith.constant 0 : index
    %c4 = arith.constant 4 : index
    %53 = vector.load %arg4[%c0_29, %c4] : memref<8x128xi32, #tpu.memory_space<vmem>>, vector<2x1xi32>
    %c0_30 = arith.constant 0 : index
    %c5_31 = arith.constant 5 : index
    %54 = vector.load %arg4[%c0_30, %c5_31] : memref<8x128xi32, #tpu.memory_space<vmem>>, vector<2x1xi32>
    %55 = vector.extract_strided_slice %43 {offsets = [0, 0], sizes = [1, 128], strides = [1, 1]} : vector<3x128xi32> to vector<1x128xi32>
    %56 = vector.extract_strided_slice %43 {offsets = [1, 0], sizes = [1, 128], strides = [1, 1]} : vector<3x128xi32> to vector<1x128xi32>
    %57 = vector.extract_strided_slice %43 {offsets = [2, 0], sizes = [1, 128], strides = [1, 1]} : vector<3x128xi32> to vector<1x128xi32>
    %58 = vector.broadcast %55 : vector<1x128xi32> to vector<2x128xi32>
    %59 = vector.broadcast %52 : vector<2x1xi32> to vector<2x128xi32>
    %60 = arith.muli %58, %59 : vector<2x128xi32>
    %61 = vector.broadcast %56 : vector<1x128xi32> to vector<2x128xi32>
    %62 = vector.broadcast %53 : vector<2x1xi32> to vector<2x128xi32>
    %63 = arith.muli %61, %62 : vector<2x128xi32>
    %64 = arith.addi %60, %63 : vector<2x128xi32>
    %65 = vector.broadcast %57 : vector<1x128xi32> to vector<2x128xi32>
    %66 = vector.broadcast %54 : vector<2x1xi32> to vector<2x128xi32>
    %67 = arith.muli %65, %66 : vector<2x128xi32>
    %68 = arith.addi %64, %67 : vector<2x128xi32>
    %c0_32 = arith.constant 0 : index
    %c8 = arith.constant 8 : index
    %c0_33 = arith.constant 0 : index
    %69 = vector.load %arg5[%c0_32, %c8, %c0_33] : memref<1x10x128xi32, #tpu.memory_space<vmem>>, vector<1x2x128xi32>
    %70 = vector.shape_cast %69 : vector<1x2x128xi32> to vector<2x128xi32>
    %71 = vector.shape_cast %68 : vector<2x128xi32> to vector<1x2x128xi32>
    tpu.vector_store %arg5[%c0_32, %c8, %c0_33], %71 {strides = array<i32>} : memref<1x10x128xi32, #tpu.memory_space<vmem>>, vector<1x2x128xi32>,
    return
  }
  func.func @transform_0(%arg0: i32, %arg1: i32) -> (i32, i32, i32) {
    %c0_i32 = arith.constant 0 : i32
    %c0_i32_0 = arith.constant 0 : i32
    return %arg0, %c0_i32, %arg1 : i32, i32, i32
  }
  func.func @transform_1(%arg0: i32, %arg1: i32) -> (i32, i32) {
    %c0_i32 = arith.constant 0 : i32
    %c0_i32_0 = arith.constant 0 : i32
    %c0_i32_1 = arith.constant 0 : i32
    return %c0_i32, %c0_i32_0 : i32, i32
  }
  func.func @transform_2(%arg0: i32, %arg1: i32) -> (i32, i32) {
    %c0_i32 = arith.constant 0 : i32
    %c0_i32_0 = arith.constant 0 : i32
    %c0_i32_1 = arith.constant 0 : i32
    return %c0_i32, %c0_i32_0 : i32, i32
  }
  func.func @transform_3(%arg0: i32, %arg1: i32) -> (i32, i32, i32) {
    %c0_i32 = arith.constant 0 : i32
    %c0_i32_0 = arith.constant 0 : i32
    return %arg0, %c0_i32, %arg1 : i32, i32, i32
  }
  func.func @transform_4(%arg0: i32, %arg1: i32) -> (i32, i32, i32) {
    %c0_i32 = arith.constant 0 : i32
    %c0_i32_0 = arith.constant 0 : i32
    return %arg0, %c0_i32, %arg1 : i32, i32, i32
  }
}

</mosaic_0001>

<llo_original>
// kernel: forward.1
$region0: #{forward.1}
  #allocation0 [shape = 'u32[]', space=smem, size = 0x4, offset = 0x4, fixed_abs, tag = 'smem constant byte address 0x4 - core index']
  #allocation1 [shape = 'u32[72,128]{1,0:T(1,128)}', space=vmem, size = 0x9000, scoped, tag = 'internal scratch']
  %s0 = inlined_call_operand.vmem [shape: f32[2,3,256], index: 0, kind: input, shape index: {}]
  %s1 = inlined_call_operand.vmem [shape: f32[8,128], index: 1, kind: input, shape index: {}]
  %s2 = inlined_call_operand.vmem [shape: s32[8,128], index: 2, kind: input, shape index: {}]
  %s3 = inlined_call_operand.vmem [shape: s32[2,10,256], index: 3, kind: output, shape index: {0}]
  %s4 = inlined_call_operand.vmem [shape: f32[2,6,256], index: 4, kind: output, shape index: {1}]
  %5 = xla_tuple %s3, %s4
  %s6 = sld [smem:[#allocation0]]
  $region87: #{forward.1} parent=0
    _
  %s8 = ssub.s32 1, %s6
  %s9 = scalar_select 0, %s8, %s6
  $region1: #{forward.1} parent=0
    #allocation2 [shape = 'u8[16384]{0}', space=vmem, size = 0x4000, scoped, tag = 'output window, operand 0']
    loop: start=0, step=1, limit=6
    $region2: #{forward.1} parent=1 // loop_pre_header
      _
    $region3: #{forward.1} parent=1 // loop_header
      %s11 = sphi 0, %s15
      %p12 = scmp.ge.s32.totalorder %s11, 6
      %s18 = sphi 0, %s30
      %s19 = sphi 0, %s26
      %s20 = sphi 0, %s18
      %s21 = sphi 0, %s19
      %s22 = sphi 0, %s20
      %s23 = sphi 0, %s21
      %s35 = sphi 0, %s37
      %s38 = sphi 0, %s35
      %s39 = sphi 0, %s38
      %s55 = sphi 0, %s39
      %s59 = sphi 0, %s59
      %s61 = sphi 0, %s59
      %s62 = sphi 0, %s61
      %s76 = sphi 0, %s62
      %s80 = sphi 0, %s80
      %s82 = sphi 0, %s80
      %s83 = sphi 0, %s82
      %s97 = sphi 0, %s83
      %s105 = sphi 0, %s107
      %s108 = sphi 0, %s105
      %s109 = sphi 0, %s108
      %s125 = sphi 0, %s109
      %s133 = sphi 0, %s135
      %s136 = sphi 0, %s133
      %s137 = sphi 0, %s136
      %s153 = sphi 0, %s137
    $region4: #{forward.1} parent=1 // loop_header_branch
      %14 = sbr.rel (%p12) target = $region8
    $region5: #{forward.1} parent=1 // loop_body
      %s16 = ssub.s32 %s11, 1
      %s17 = ssub.s32 %s11, 2
      %s24 = sadd.s32 1, %s19
      %p25 = scmp.ge.s32.totalorder %s24, 2
      %s26 = scalar_select %p25, 0, %s24
      %s27 = sadd.s32 1, %s18
      %s28 = scalar_select %p25, %s27, %s18
      %p29 = scmp.ge.s32.totalorder %s28, 2
      %s30 = scalar_select %p29, 0, %s28
      %s31 = ssub.s32 %s18, %s30
      %s32 = ssub.s32 %s19, %s26
      %s33 = sor.u32 %s31, %s32
      %p34 = scmp.eq.s32.totalorder %s33, 0
      %s36 = sadd.s32 %s35, 1
      %s37 = scalar_select %p34, %s35, %s36
      %p40 = pneg %p34
      %p41 = scmp.eq.s32.totalorder %s11, 3
      %p42 = por %p40, %p41
      %p43 = scmp.ne.s32.totalorder %s35, %s38
      %p44 = scmp.eq.s32.totalorder %s11, 0
      %p45 = por %p43, %p44
      %p46 = scmp.ne.s32.totalorder %s35, %s38
      %p47 = scmp.eq.s32.totalorder %s16, 3
      %p48 = por %p46, %p47
      %p49 = scmp.ne.s32.totalorder %s38, %s39
      %p50 = scmp.eq.s32.totalorder %s16, 0
      %p51 = por %p49, %p50
      %p52 = scmp.ne.s32.totalorder %s38, %s39
      %p53 = scmp.eq.s32.totalorder %s17, 3
      %p54 = por %p52, %p53
      %p56 = scmp.ne.s32.totalorder %s39, %s55
      %p57 = scmp.eq.s32.totalorder %s17, 0
      %p58 = por %p56, %p57
      %s60 = sadd.s32 %s59, 1
      %p63 = scmp.eq.s32.totalorder %s11, 3
      %p64 = scmp.ne.s32.totalorder %s59, %s61
      %p65 = scmp.eq.s32.totalorder %s11, 0
      %p66 = por %p64, %p65
      %p67 = scmp.ne.s32.totalorder %s59, %s61
      %p68 = scmp.eq.s32.totalorder %s16, 3
      %p69 = por %p67, %p68
      %p70 = scmp.ne.s32.totalorder %s61, %s62
      %p71 = scmp.eq.s32.totalorder %s16, 0
      %p72 = por %p70, %p71
      %p73 = scmp.ne.s32.totalorder %s61, %s62
      %p74 = scmp.eq.s32.totalorder %s17, 3
      %p75 = por %p73, %p74
      %p77 = scmp.ne.s32.totalorder %s62, %s76
      %p78 = scmp.eq.s32.totalorder %s17, 0
      %p79 = por %p77, %p78
      %s81 = sadd.s32 %s80, 1
      %p84 = scmp.eq.s32.totalorder %s11, 3
      %p85 = scmp.ne.s32.totalorder %s80, %s82
      %p86 = scmp.eq.s32.totalorder %s11, 0
      %p87 = por %p85, %p86
      %p88 = scmp.ne.s32.totalorder %s80, %s82
      %p89 = scmp.eq.s32.totalorder %s16, 3
      %p90 = por %p88, %p89
      %p91 = scmp.ne.s32.totalorder %s82, %s83
      %p92 = scmp.eq.s32.totalorder %s16, 0
      %p93 = por %p91, %p92
      %p94 = scmp.ne.s32.totalorder %s82, %s83
      %p95 = scmp.eq.s32.totalorder %s17, 3
      %p96 = por %p94, %p95
      %p98 = scmp.ne.s32.totalorder %s83, %s97
      %p99 = scmp.eq.s32.totalorder %s17, 0
      %p100 = por %p98, %p99
      %s101 = ssub.s32 %s18, %s30
      %s102 = ssub.s32 %s19, %s26
      %s103 = sor.u32 %s101, %s102
      %p104 = scmp.eq.s32.totalorder %s103, 0
      %s106 = sadd.s32 %s105, 1
      %s107 = scalar_select %p104, %s105, %s106
      %p110 = pneg %p104
      %p111 = scmp.eq.s32.totalorder %s11, 3
      %p112 = por %p110, %p111
      %p113 = scmp.ne.s32.totalorder %s105, %s108
      %p114 = scmp.eq.s32.totalorder %s11, 0
      %p115 = por %p113, %p114
      %p116 = scmp.ne.s32.totalorder %s105, %s108
      %p117 = scmp.eq.s32.totalorder %s16, 3
      %p118 = por %p116, %p117
      %p119 = scmp.ne.s32.totalorder %s108, %s109
      %p120 = scmp.eq.s32.totalorder %s16, 0
      %p121 = por %p119, %p120
      %p122 = scmp.ne.s32.totalorder %s108, %s109
      %p123 = scmp.eq.s32.totalorder %s17, 3
      %p124 = por %p122, %p123
      %p126 = scmp.ne.s32.totalorder %s109, %s125
      %p127 = scmp.eq.s32.totalorder %s17, 0
      %p128 = por %p126, %p127
      %s129 = ssub.s32 %s18, %s30
      %s130 = ssub.s32 %s19, %s26
      %s131 = sor.u32 %s129, %s130
      %p132 = scmp.eq.s32.totalorder %s131, 0
      %s134 = sadd.s32 %s133, 1
      %s135 = scalar_select %p132, %s133, %s134
      %p138 = pneg %p132
      %p139 = scmp.eq.s32.totalorder %s11, 3
      %p140 = por %p138, %p139
      %p141 = scmp.ne.s32.totalorder %s133, %s136
      %p142 = scmp.eq.s32.totalorder %s11, 0
      %p143 = por %p141, %p142
      %p144 = scmp.ne.s32.totalorder %s133, %s136
      %p145 = scmp.eq.s32.totalorder %s16, 3
      %p146 = por %p144, %p145
      %p147 = scmp.ne.s32.totalorder %s136, %s137
      %p148 = scmp.eq.s32.totalorder %s16, 0
      %p149 = por %p147, %p148
      %p150 = scmp.ne.s32.totalorder %s136, %s137
      %p151 = scmp.eq.s32.totalorder %s17, 3
      %p152 = por %p150, %p151
      %p154 = scmp.ne.s32.totalorder %s137, %s153
      %p155 = scmp.eq.s32.totalorder %s17, 0
      %p156 = por %p154, %p155
      %p157 = scmp.le.s32.totalorder 1, %s11
      %p158 = scmp.lt.s32.totalorder %s11, 5
      %p159 = pnand %p157, %p158
      %p160 = pneg %p159
      // Predicated region
      $region9: #{forward.1} parent=5 // pred_check
        _
      $region10: #{forward.1} parent=5 // pred_check_branch
        %162 = sbr.rel (%p159) target = $region12
      $region11: #{forward.1} parent=5 // pred_region
        %s163 = ssub.s32 %s11, 1
        // Predicated region
        $region13: #{forward.1} parent=11 // pred_check
          %p164 = pneg %p72
        $region14: #{forward.1} parent=11 // pred_check_branch
          %166 = sbr.rel (%p164) target = $region16
        $region15: #{forward.1} parent=11 // pred_region
          _
        $region16: #{forward.1} parent=11 // pred_fallthru
          _
        // Predicated region
        $region17: #{forward.1} parent=11 // pred_check
          %p167 = pneg %p93
        $region18: #{forward.1} parent=11 // pred_check_branch
          %169 = sbr.rel (%p167) target = $region20
        $region19: #{forward.1} parent=11 // pred_region
          _
        $region20: #{forward.1} parent=11 // pred_fallthru
          _
      $region12: #{forward.1} parent=5 // pred_fallthru
        _
      %p170 = scmp.lt.s32.totalorder %s11, 4
      // Predicated region
      $region21: #{forward.1} parent=5 // pred_check
        %p171 = pneg %p170
      $region22: #{forward.1} parent=5 // pred_check_branch
        %173 = sbr.rel (%p171) target = $region24
      $region23: #{forward.1} parent=5 // pred_region
        // Predicated region
        $region25: #{forward.1} parent=23 // pred_check
          %p174 = pneg %p45
        $region26: #{forward.1} parent=23 // pred_check_branch
          %176 = sbr.rel (%p174) target = $region28
        $region27: #{forward.1} parent=23 // pred_region
          %p177 = scmp.lt.s32.totalorder %s18, 1
          %s178 = scalar_select %p177, %s18, 1
          %p179 = scmp.lt.s32.totalorder %s19, 1
          %s180 = scalar_select %p179, %s19, 1
          %s181 = smul.addr %s178, 2
          %s182 = sadd.s32 %s180, %s181
          %s183 = smul.addr %s182, 4
          %s184 = scalar_lea.vmem %s0, %s183
        $region28: #{forward.1} parent=23 // pred_fallthru
          _
      $region24: #{forward.1} parent=5 // pred_fallthru
        _
      %p185 = scmp.le.s32.totalorder 1, %s11
      %p186 = scmp.lt.s32.totalorder %s11, 5
      %p187 = pnand %p185, %p186
      %p188 = pneg %p187
      // Predicated region
      $region29: #{forward.1} parent=5 // pred_check
        _
      $region30: #{forward.1} parent=5 // pred_check_branch
        %190 = sbr.rel (%p187) target = $region32
      $region31: #{forward.1} parent=5 // pred_region
        %s191 = ssub.s32 %s11, 1
        %p192 = scmp.lt.s32.totalorder %s20, 1
        %s193 = scalar_select %p192, %s20, 1
        %p194 = scmp.lt.s32.totalorder %s21, 1
        %s195 = scalar_select %p194, %s21, 1
        %s196 = smul.addr %s193, 2
        %s197 = sadd.s32 %s195, %s196
        %s198 = smul.addr %s197, 4
        %s199 = scalar_lea.vmem %s0, %s198
        %p200 = pneg %p51
        %p201 = pneg %p48
        %p202 = pneg %p72
        %p203 = pneg %p69
        %p204 = pneg %p93
        %p205 = pneg %p90
        %p206 = pneg %p121
        %p207 = pneg %p118
        %s208 = sand.u32 %s108, 1
        %s209 = sand.u32 %s108, 1
        %s210 = smul.addr %s209, 16
        %s211 = scalar_lea.vmem [#allocation2], %s210
        %p212 = pneg %p149
        %p213 = pneg %p146
        %p214 = scmp.lt.s32.totalorder %s20, 1
        %s215 = scalar_select %p214, %s20, 1
        %p216 = scmp.lt.s32.totalorder %s21, 1
        %s217 = scalar_select %p216, %s21, 1
        %s218 = smul.addr %s215, 2
        %s219 = sadd.s32 %s217, %s218
        %s220 = smul.addr %s219, 8
        %s221 = scalar_lea.vmem %s4, %s220
        %p222 = scmp.lt.s32.totalorder %s20, 1
        %s223 = scalar_select %p222, %s20, 1
        %p224 = scmp.lt.s32.totalorder %s21, 1
        %s225 = scalar_select %p224, %s21, 1
        %s226 = smul.addr %s223, 2
        %s227 = sadd.s32 %s225, %s226
        %s228 = smul.addr %s227, 4
        %s229 = scalar_lea.vmem %s0, %s228
        %p230 = scmp.lt.s32.totalorder %s20, 1
        %s231 = scalar_select %p230, %s20, 1
        %p232 = scmp.lt.s32.totalorder %s21, 1
        %s233 = scalar_select %p232, %s21, 1
        %s234 = smul.addr %s231, 2
        %s235 = sadd.s32 %s233, %s234
        %s236 = smul.addr %s235, 8
        %s237 = scalar_lea.vmem %s4, %s236
        %v238 = vld [vmem:[%s229] sm:$0x7]
        %v239 = vld [vmem:[%s1] sm:$0x7]
        %241 = vset.pattern.permute.xlu0 0
        %242 = vperm.xlu0 %241, %v239
        %v243 = vpop.permute.xlu0 %242
        %v245 = vmul.f32 %v238, %v243
        %246 = vset.pattern.permute.xlu0 1
        %247 = vperm.xlu0 %246, %v239
        %v248 = vpop.permute.xlu0 %247
        %v250 = vadd.f32 %v245, %v248
        %v251 = vcvt.f32.s32.to.zero.pseudo %v250
        %252 = vst [vmem:[%s211] sm:$0x7] %v251
        %v253 = vcvt.s32.f32 %v251
        %v254 = vsub.f32 %v250, %v253
        %255 = vst [vmem:[%s237] sm:$0x7] %v254
        %v256 = vld [vmem:[%s2] sm:$0x3]
        %v257 = vperm.slane %v251, 0
        %258 = vset.pattern.permute.xlu0 0
        %259 = vperm.xlu0 %258, %v256
        %v260 = vpop.permute.xlu0 %259
        %v261 = vmul.u32 %v257, %v260
        %v262 = vperm.slane %v251, 1
        %263 = vset.pattern.permute.xlu0 1
        %264 = vperm.xlu0 %263, %v256
        %v265 = vpop.permute.xlu0 %264
        %v266 = vmul.u32 %v262, %v265
        %v267 = vadd.s32 %v261, %v266
        %v268 = vperm.slane %v251, 2
        %269 = vset.pattern.permute.xlu0 2
        %270 = vperm.xlu0 %269, %v256
        %v271 = vpop.permute.xlu0 %270
        %v272 = vmul.u32 %v268, %v271
        %v273 = vadd.s32 %v267, %v272
        %274 = vst [vmem:[%s211 + $0x3] sm:$0x3] %v273
        %v275 = vld [vmem:[%s1] sm:$0x7]
        %277 = vset.pattern.permute.xlu0 2
        %278 = vperm.xlu0 %277, %v275
        %v279 = vpop.permute.xlu0 %278
        %v281 = vmul.f32 %v238, %v279
        %282 = vset.pattern.permute.xlu0 3
        %283 = vperm.xlu0 %282, %v275
        %v284 = vpop.permute.xlu0 %283
        %v286 = vadd.f32 %v281, %v284
        %v287 = vcvt.f32.s32.to.zero.pseudo %v286
        %288 = vst [vmem:[%s211 + $0x5] sm:$0x7] %v287
        %v289 = vcvt.s32.f32 %v287
        %v290 = vsub.f32 %v286, %v289
        %291 = vst [vmem:[%s237 + $0x3] sm:$0x7] %v290
        %v292 = vld [vmem:[%s2] sm:$0x3]
        %v293 = vperm.slane %v287, 0
        %294 = vset.pattern.permute.xlu0 3
        %295 = vperm.xlu0 %294, %v292
        %v296 = vpop.permute.xlu0 %295
        %v297 = vmul.u32 %v293, %v296
        %v298 = vperm.slane %v287, 1
        %299 = vset.pattern.permute.xlu0 4
        %300 = vperm.xlu0 %299, %v292
        %v301 = vpop.permute.xlu0 %300
        %v302 = vmul.u32 %v298, %v301
        %v303 = vadd.s32 %v297, %v302
        %v304 = vperm.slane %v287, 2
        %305 = vset.pattern.permute.xlu0 5
        %306 = vperm.xlu0 %305, %v292
        %v307 = vpop.permute.xlu0 %306
        %v308 = vmul.u32 %v304, %v307
        %v309 = vadd.s32 %v303, %v308
        %310 = vst [vmem:[%s211 + $0x8] sm:$0x3] %v309
        %s311 = sand.u32 %s108, 1
        %s312 = sand.u32 %s108, 1
        %s313 = smul.addr %s312, 16
        %s314 = scalar_lea.vmem [#allocation2], %s313
        %p315 = scmp.lt.s32.totalorder %s20, 1
        %s316 = scalar_select %p315, %s20, 1
        %p317 = scmp.lt.s32.totalorder %s21, 1
        %s318 = scalar_select %p317, %s21, 1
        %s319 = smul.addr %s316, 2
        %s320 = sadd.s32 %s318, %s319
        %s321 = smul.addr %s320, 8
        %s322 = scalar_lea.vmem %s4, %s321
        // Predicated region
        $region33: #{forward.1} parent=31 // pred_check
          %p323 = pneg %p118
        $region34: #{forward.1} parent=31 // pred_check_branch
          %325 = sbr.rel (%p323) target = $region36
        $region35: #{forward.1} parent=31 // pred_region
          %s326 = smul.addr %s20, 4
          %s327 = sadd.s32 %s21, %s326
          %s328 = smul.addr %s327, 8
          %s329 = scalar_lea.vmem %s3, %s328
          // Predicated region
          $region37: #{forward.1} parent=35 // pred_check
            _
          $region38: #{forward.1} parent=35 // pred_check_branch
            %331 = sbr.rel (0) target = $region40
          $region39: #{forward.1} parent=35 // pred_region
            // Predicated region
            $region41: #{forward.1} parent=39 // pred_check
              _
            $region42: #{forward.1} parent=39 // pred_check_branch
              %333 = sbr.rel (0) target = $region44
            $region43: #{forward.1} parent=39 // pred_region
              // Predicated region
              $region56: #{forward.1} parent=43 // pred_check
                _
              $region57: #{forward.1} parent=43 // pred_check_branch
                %351 = sbr.rel (0) target = $region59
              $region58: #{forward.1} parent=43 // pred_region
                loop: start=0, step=1, limit=1
                $region60: #{forward.1} parent=58 // loop_pre_header
                  _
                $region61: #{forward.1} parent=58 // loop_header
                  %s353 = sphi 0, %s357
                  %p354 = scmp.ge.s32.totalorder %s353, 1
                  %s358 = sphi %s314, %s314
                  %s359 = sphi %s329, %s329
                $region62: #{forward.1} parent=58 // loop_header_branch
                  %356 = sbr.rel (%p354) target = $region66
                $region63: #{forward.1} parent=58 // loop_body
                  %v360 = vld [vmem:[%s358] sm:$0xff]
                  %361 = vst [vmem:[%s359] sm:$0xff] %v360
                  %v362 = vld [vmem:[%s358 + $0x8] sm:$0xff]
                  %363 = vst [vmem:[%s359 + $0x10] sm:$0xff] %v362
                $region64: #{forward.1} parent=58 // loop_footer
                  %s357 = sadd.s32 1, %s353
                $region65: #{forward.1} parent=58 // loop_footer_branch
                  %352 = sbr.rel target = $region61
                $region66: #{forward.1} parent=58 // loop_exit
                  _
              $region59: #{forward.1} parent=43 // pred_fallthru
                _
              // Predicated region
              $region67: #{forward.1} parent=43 // pred_check
                _
              $region68: #{forward.1} parent=43 // pred_check_branch
                %365 = sbr.rel target = $region70
              $region69: #{forward.1} parent=43 // pred_region
                _
              $region70: #{forward.1} parent=43 // pred_fallthru
                _
            $region44: #{forward.1} parent=39 // pred_fallthru
              _
            // Predicated region
            $region45: #{forward.1} parent=39 // pred_check
              _
            $region46: #{forward.1} parent=39 // pred_check_branch
              %335 = sbr.rel target = $region48
            $region47: #{forward.1} parent=39 // pred_region
              %s337 = ssub.s32 256, 1
              loop: start=0, step=1, limit=1
              $region49: #{forward.1} parent=47 // loop_pre_header
                _
              $region50: #{forward.1} parent=47 // loop_header
                %s339 = sphi 0, %s343
                %p340 = scmp.ge.s32.totalorder %s339, 1
                %s344 = sphi %s314, %s314
                %s345 = sphi %s329, %s329
              $region51: #{forward.1} parent=47 // loop_header_branch
                %342 = sbr.rel (%p340) target = $region55
              $region52: #{forward.1} parent=47 // loop_body
                %v346 = vld [vmem:[%s344] sm:%s337]
                %347 = vst [vmem:[%s345] sm:%s337] %v346
                %v348 = vld [vmem:[%s344 + $0x8] sm:%s337]
                %349 = vst [vmem:[%s345 + $0x10] sm:%s337] %v348
              $region53: #{forward.1} parent=47 // loop_footer
                %s343 = sadd.s32 1, %s339
              $region54: #{forward.1} parent=47 // loop_footer_branch
                %338 = sbr.rel target = $region50
              $region55: #{forward.1} parent=47 // loop_exit
                _
            $region48: #{forward.1} parent=39 // pred_fallthru
              _
          $region40: #{forward.1} parent=35 // pred_fallthru
            _
          %366 = vnop
        $region36: #{forward.1} parent=31 // pred_fallthru
          _
        // Predicated region
        $region71: #{forward.1} parent=31 // pred_check
          %p367 = pneg %p146
        $region72: #{forward.1} parent=31 // pred_check_branch
          %369 = sbr.rel (%p367) target = $region74
        $region73: #{forward.1} parent=31 // pred_region
          _
        $region74: #{forward.1} parent=31 // pred_fallthru
          _
      $region32: #{forward.1} parent=5 // pred_fallthru
        _
      %p370 = scmp.le.s32.totalorder 2, %s11
      // Predicated region
      $region75: #{forward.1} parent=5 // pred_check
        %p371 = pneg %p370
      $region76: #{forward.1} parent=5 // pred_check_branch
        %373 = sbr.rel (%p371) target = $region78
      $region77: #{forward.1} parent=5 // pred_region
        %s374 = ssub.s32 %s11, 2
        // Predicated region
        $region79: #{forward.1} parent=77 // pred_check
          %p375 = pneg %p124
        $region80: #{forward.1} parent=77 // pred_check_branch
          %377 = sbr.rel (%p375) target = $region82
        $region81: #{forward.1} parent=77 // pred_region
          %s378 = sand.u32 %s109, 1
          %s379 = sand.u32 %s109, 1
          %s380 = smul.addr %s379, 16
          %s381 = scalar_lea.vmem [#allocation2], %s380
        $region82: #{forward.1} parent=77 // pred_fallthru
          _
        // Predicated region
        $region83: #{forward.1} parent=77 // pred_check
          %p382 = pneg %p152
        $region84: #{forward.1} parent=77 // pred_check_branch
          %384 = sbr.rel (%p382) target = $region86
        $region85: #{forward.1} parent=77 // pred_region
          %p385 = scmp.lt.s32.totalorder %s22, 1
          %s386 = scalar_select %p385, %s22, 1
          %p387 = scmp.lt.s32.totalorder %s23, 1
          %s388 = scalar_select %p387, %s23, 1
          %s389 = smul.addr %s386, 2
          %s390 = sadd.s32 %s388, %s389
          %s391 = smul.addr %s390, 8
          %s392 = scalar_lea.vmem %s4, %s391
        $region86: #{forward.1} parent=77 // pred_fallthru
          _
      $region78: #{forward.1} parent=5 // pred_fallthru
        _
    $region6: #{forward.1} parent=1 // loop_footer
      %s15 = sadd.s32 1, %s11
    $region7: #{forward.1} parent=1 // loop_footer_branch
      %10 = sbr.rel target = $region3
    $region8: #{forward.1} parent=1 // loop_exit
      _

</llo_original>
